<compile_context>
chip_gen: v7x
topology: tpu7x:2x2x1
jax: 0.10.0
libtpu: 0.0.40
codegen_flags: <defaults>
</compile_context>

<pallas_src>
import functools

import jax
import jax.numpy as jnp
from jax.experimental import pallas as pl
from jax.experimental.pallas import tpu as pltpu


def _plane_to_depth_kernel(coef_ref, o_ref, *, H, W):
    # coef_ref: (N*P, 4)   columns = [cu, cv, c0, off]
    # o_ref:    (N*P, H*W) depth, lane-dense (H*W is a multiple of 128)
    HW = o_ref.shape[1]

    # Constant pixel-center grids generated in-kernel (no HBM traffic).
    idx = jax.lax.broadcasted_iota(jnp.int32, (1, HW), 1)
    if (W & (W - 1)) == 0:  # power of two: mask/shift on the VPU
        col = idx & (W - 1)
        row = idx >> (W.bit_length() - 1)
    else:  # generic fallback
        col = jax.lax.rem(idx, W)
        row = jax.lax.div(idx, W)
    u = (col.astype(jnp.float32) + 0.5) * (1.0 / W)      # (1, HW)
    v = (row.astype(jnp.float32) + 0.5) * (1.0 / H)      # (1, HW)

    coefs = coef_ref[...]                                # single (NP, 4) load
    cu = coefs[:, 0:1]
    cv = coefs[:, 1:2]
    c0 = coefs[:, 2:3]
    off = coefs[:, 3:4]

    # ranges . normal  ==  U*cu + V*cv + c0  (implicit (1,HW) x (NP,1) broadcast)
    dot = u * cu + v * cv + c0                           # (NP, HW)
    d = jnp.maximum(dot, 1e-4)
    r = pl.reciprocal(d, approx=True)                    # EUP slot
    r = r * (2.0 - d * r)                                # one Newton step (~f32 exact)
    # off >= 0 and d > 0  =>  depth >= 0; only the upper clamp remains.
    o_ref[...] = jnp.minimum(off * r, 10.0)


@functools.partial(jax.jit, static_argnames=("H", "W"))
def _plane_to_depth_impl(intrinsics, plane, H, W):
    N, P, _ = plane.shape
    NP = N * P
    HW = H * W
    intr = intrinsics.astype(jnp.float32)
    plane = plane.astype(jnp.float32)

    # Tiny O(N*P) scalar prep (fused under the same jit as the kernel call):
    #   dot = urange*nx + ny - vrange*nz = U*cu + V*cv + c0
    off = jnp.linalg.norm(plane, axis=-1)                        # (N, P)
    nrm = plane / jnp.maximum(off[..., None], 1e-4)              # (N, P, 3)
    fx, fy = intr[:, 0], intr[:, 1]
    cx, cy = intr[:, 2], intr[:, 3]
    su, sv = intr[:, 4], intr[:, 5]
    nx, ny, nz = nrm[..., 0], nrm[..., 1], nrm[..., 2]           # (N, P)
    cu = (su / fx)[:, None] * nx
    cv = -(sv / fy)[:, None] * nz
    c0 = ny - (cx / fx)[:, None] * nx + (cy / fy)[:, None] * nz
    coefs = jnp.stack([cu, cv, c0, off], axis=-1).reshape(NP, 4)  # (NP, 4)

    out_flat = pl.pallas_call(
        functools.partial(_plane_to_depth_kernel, H=H, W=W),
        out_shape=jax.ShapeDtypeStruct((NP, HW), jnp.float32),
        in_specs=[pl.BlockSpec(memory_space=pltpu.MemorySpace.VMEM)],
        out_specs=pl.BlockSpec(memory_space=pltpu.MemorySpace.VMEM),
    )(coefs)
    return out_flat.reshape(N, P, H, W)


def plane_to_depth_layer(intrinsics, plane, mask=None, H=48, W=64):
    """Pallas equivalent of PlaneToDepthLayer.forward (depth-only path).

    intrinsics: (N, 6) float32 -- [fx, fy, cx, cy, su, sv] per batch element
    plane:      (N, P, 3) float32
    mask:       accepted for API parity; the PyTorch reference forwards it as the
                `return_XYZ` flag, taken here to be falsy (depth-only path).
    returns:    (N, P, H, W) float32
    """
    # TODO(synk): return_XYZ=True branch (depth[..., None] * ranges) not implemented.
    del mask
    return _plane_to_depth_impl(intrinsics, plane, H=H, W=W)


def _reference(intrinsics, plane, H, W):
    """Pure-JAX transcription of the PyTorch module (for verification)."""
    N, P, _ = plane.shape
    U = jnp.broadcast_to((jnp.arange(W, dtype=jnp.float32) + 0.5)[None, :] / W, (H, W))
    V = jnp.broadcast_to((jnp.arange(H, dtype=jnp.float32) + 0.5)[:, None] / H, (H, W))
    outs = []
    for i in range(N):
        K = intrinsics[i]
        ur = (U * K[4] - K[2]) / K[0]
        vr = (V * K[5] - K[3]) / K[1]
        ranges = jnp.stack([ur, jnp.ones((H, W), jnp.float32), -vr], -1)     # (H, W, 3)
        off = jnp.linalg.norm(plane[i], axis=-1)                             # (P,)
        nrm = plane[i] / jnp.maximum(off[:, None], 1e-4)                     # (P, 3)
        dot = jnp.sum(ranges[:, :, None, :] * nrm[None, None, :, :], -1)     # (H, W, P)
        depth = off / jnp.maximum(dot, 1e-4)
        depth = jnp.clip(depth, 0.0, 10.0)
        outs.append(jnp.transpose(depth, (2, 0, 1)))                         # (P, H, W)
    return jnp.stack(outs, 0)


if __name__ == "__main__":
    key = jax.random.PRNGKey(0)
    k1, k2 = jax.random.split(key)

    N, P, H, W = 2, 4, 48, 64  # H/W match PlaneToDepth defaults; P planes per image
    # [fx, fy, cx, cy, su, sv] — keep entries positive and away from zero.
    intrinsics = jnp.abs(jax.random.normal(k1, (N, 6), dtype=jnp.float32)) + 0.5
    plane = jax.random.normal(k2, (N, P, 3), dtype=jnp.float32)
    mask = jnp.zeros((N,), dtype=bool)  # falsy, as the reference's return_XYZ path requires

    out = plane_to_depth_layer(intrinsics, plane, mask, H=H, W=W)
    out = jax.block_until_ready(out)

    ref = _reference(intrinsics, plane, H, W)
    assert out.shape == (N, P, H, W), out.shape
    assert out.dtype == jnp.float32
    # Tolerance reflects f32 reassociation of the affine dot product (coefficient
    # folding + Newton-refined reciprocal-multiply instead of a fused divide).
    assert jnp.allclose(out, ref, rtol=1e-4, atol=5e-4), float(jnp.max(jnp.abs(out - ref)))

    print("KERNEL_OK")
</pallas_src>

<mosaic_0001>
module attributes {stable_mosaic.version = 11 : i64} {
  func.func @_plane_to_depth_kernel(%arg0: memref<8x4xf32, #tpu.memory_space<vmem>>, %arg1: memref<8x3072xf32, #tpu.memory_space<vmem>>) attributes {dimension_semantics = [], scalar_prefetch = 0 : i64, scratch_operands = 0 : i64, tpu.core_type = #tpu.core_type<tc>} {
    %0 = tpu.iota {dimensions = array<i32: 1>} : vector<1x3072xi32>
    %c63_i32 = arith.constant 63 : i32
    %1 = vector.broadcast %c63_i32 : i32 to vector<1x3072xi32>
    %2 = arith.andi %0, %1 : vector<1x3072xi32>
    %c6_i32 = arith.constant 6 : i32
    %3 = vector.broadcast %c6_i32 : i32 to vector<1x3072xi32>
    %4 = arith.shrsi %0, %3 : vector<1x3072xi32>
    %5 = arith.sitofp %2 : vector<1x3072xi32> to vector<1x3072xf32>
    %cst = arith.constant 5.000000e-01 : f32
    %6 = vector.broadcast %cst : f32 to vector<1x3072xf32>
    %7 = arith.addf %5, %6 : vector<1x3072xf32>
    %cst_0 = arith.constant 1.562500e-02 : f32
    %8 = vector.broadcast %cst_0 : f32 to vector<1x3072xf32>
    %9 = arith.mulf %7, %8 : vector<1x3072xf32>
    %10 = arith.sitofp %4 : vector<1x3072xi32> to vector<1x3072xf32>
    %cst_1 = arith.constant 5.000000e-01 : f32
    %11 = vector.broadcast %cst_1 : f32 to vector<1x3072xf32>
    %12 = arith.addf %10, %11 : vector<1x3072xf32>
    %cst_2 = arith.constant 0.020833334 : f32
    %13 = vector.broadcast %cst_2 : f32 to vector<1x3072xf32>
    %14 = arith.mulf %12, %13 : vector<1x3072xf32>
    %c0 = arith.constant 0 : index
    %c0_3 = arith.constant 0 : index
    %15 = vector.load %arg0[%c0, %c0_3] : memref<8x4xf32, #tpu.memory_space<vmem>>, vector<8x4xf32>
    %16 = vector.extract_strided_slice %15 {offsets = [0, 0], sizes = [8, 1], strides = [1, 1]} : vector<8x4xf32> to vector<8x1xf32>
    %17 = vector.extract_strided_slice %15 {offsets = [0, 1], sizes = [8, 1], strides = [1, 1]} : vector<8x4xf32> to vector<8x1xf32>
    %18 = vector.extract_strided_slice %15 {offsets = [0, 2], sizes = [8, 1], strides = [1, 1]} : vector<8x4xf32> to vector<8x1xf32>
    %19 = vector.extract_strided_slice %15 {offsets = [0, 3], sizes = [8, 1], strides = [1, 1]} : vector<8x4xf32> to vector<8x1xf32>
    %20 = vector.broadcast %9 : vector<1x3072xf32> to vector<8x3072xf32>
    %21 = vector.broadcast %16 : vector<8x1xf32> to vector<8x3072xf32>
    %22 = arith.mulf %20, %21 : vector<8x3072xf32>
    %23 = vector.broadcast %14 : vector<1x3072xf32> to vector<8x3072xf32>
    %24 = vector.broadcast %17 : vector<8x1xf32> to vector<8x3072xf32>
    %25 = arith.mulf %23, %24 : vector<8x3072xf32>
    %26 = arith.addf %22, %25 : vector<8x3072xf32>
    %27 = vector.broadcast %18 : vector<8x1xf32> to vector<8x3072xf32>
    %28 = arith.addf %26, %27 : vector<8x3072xf32>
    %cst_4 = arith.constant 9.99999974E-5 : f32
    %29 = vector.broadcast %cst_4 : f32 to vector<8x3072xf32>
    %30 = arith.maximumf %28, %29 : vector<8x3072xf32>
    %31 = tpu.reciprocal %30 {approx = true} : vector<8x3072xf32> -> vector<8x3072xf32>
    %32 = arith.mulf %30, %31 : vector<8x3072xf32>
    %cst_5 = arith.constant 2.000000e+00 : f32
    %33 = vector.broadcast %cst_5 : f32 to vector<8x3072xf32>
    %34 = arith.subf %33, %32 : vector<8x3072xf32>
    %35 = arith.mulf %31, %34 : vector<8x3072xf32>
    %36 = vector.broadcast %19 : vector<8x1xf32> to vector<8x3072xf32>
    %37 = arith.mulf %36, %35 : vector<8x3072xf32>
    %cst_6 = arith.constant 1.000000e+01 : f32
    %38 = vector.broadcast %cst_6 : f32 to vector<8x3072xf32>
    %39 = arith.minimumf %37, %38 : vector<8x3072xf32>
    %c0_7 = arith.constant 0 : index
    %c0_8 = arith.constant 0 : index
    %40 = vector.load %arg1[%c0_7, %c0_8] : memref<8x3072xf32, #tpu.memory_space<vmem>>, vector<8x3072xf32>
    tpu.vector_store %arg1[%c0_7, %c0_8], %39 {strides = array<i32>} : memref<8x3072xf32, #tpu.memory_space<vmem>>, vector<8x3072xf32>,
    return
  }
}

</mosaic_0001>

<llo_original>
// kernel: _plane_to_depth_impl.1
$region0: #{_plane_to_depth_impl.1}
  #allocation0 [shape = 'u32[]', space=smem, size = 0x4, offset = 0x4, fixed_abs, tag = 'smem constant byte address 0x4 - core index']
  #allocation1 [shape = 'u32[144,128]{1,0:T(1,128)}', space=vmem, size = 0x12000, scoped, tag = 'internal scratch']
  %s0 = inlined_call_operand.vmem [shape: f32[8,4], index: 0, kind: input, shape index: {}]
  %s1 = inlined_call_operand.vmem [shape: f32[8,3072], index: 1, kind: output, shape index: {}]
  %s2 = sld [smem:[#allocation0]]
  $region14: #{_plane_to_depth_impl.1} parent=0
    _
  %s4 = ssub.s32 1, %s2
  %s5 = scalar_select 0, %s4, %s2
  // Predicated region
  $region2: #{_plane_to_depth_impl.1} parent=0 // pred_check
    _
  $region3: #{_plane_to_depth_impl.1} parent=0 // pred_check_branch
    %7 = sbr.rel (0) target = $region5
  $region4: #{_plane_to_depth_impl.1} parent=0 // pred_region
    _
  $region5: #{_plane_to_depth_impl.1} parent=0 // pred_fallthru
    _
  %v8 = vlaneseq
  %v9 = vand.u32 %v8, 127
  %v10 = vadd.s32 %v9, 128
  %v11 = vadd.s32 %v9, 256
  %v12 = vadd.s32 %v9, 384
  %v13 = vadd.s32 %v9, 512
  %v14 = vadd.s32 %v9, 640
  %v15 = vadd.s32 %v9, 768
  %v16 = vadd.s32 %v9, 896
  %v17 = vadd.s32 %v9, 1024
  %v18 = vadd.s32 %v9, 1152
  %v19 = vadd.s32 %v9, 1280
  %v20 = vadd.s32 %v9, 1408
  %v21 = vadd.s32 %v9, 1536
  %v22 = vadd.s32 %v9, 1664
  %v23 = vadd.s32 %v9, 1792
  %v24 = vadd.s32 %v9, 1920
  %v25 = vadd.s32 %v9, 2048
  %v26 = vadd.s32 %v9, 2176
  %v27 = vadd.s32 %v9, 2304
  %v28 = vadd.s32 %v9, 2432
  %v29 = vadd.s32 %v9, 2560
  %v30 = vadd.s32 %v9, 2688
  %v31 = vadd.s32 %v9, 2816
  %v32 = vadd.s32 %v9, 2944
  %v33 = vand.u32 %v9, 63
  %v34 = vand.u32 %v10, 63
  %v35 = vand.u32 %v11, 63
  %v36 = vand.u32 %v12, 63
  %v37 = vand.u32 %v13, 63
  %v38 = vand.u32 %v14, 63
  %v39 = vand.u32 %v15, 63
  %v40 = vand.u32 %v16, 63
  %v41 = vand.u32 %v17, 63
  %v42 = vand.u32 %v18, 63
  %v43 = vand.u32 %v19, 63
  %v44 = vand.u32 %v20, 63
  %v45 = vand.u32 %v21, 63
  %v46 = vand.u32 %v22, 63
  %v47 = vand.u32 %v23, 63
  %v48 = vand.u32 %v24, 63
  %v49 = vand.u32 %v25, 63
  %v50 = vand.u32 %v26, 63
  %v51 = vand.u32 %v27, 63
  %v52 = vand.u32 %v28, 63
  %v53 = vand.u32 %v29, 63
  %v54 = vand.u32 %v30, 63
  %v55 = vand.u32 %v31, 63
  %v56 = vand.u32 %v32, 63
  %v57 = vshra.s32 %v9, 6
  %v58 = vshra.s32 %v10, 6
  %v59 = vshra.s32 %v11, 6
  %v60 = vshra.s32 %v12, 6
  %v61 = vshra.s32 %v13, 6
  %v62 = vshra.s32 %v14, 6
  %v63 = vshra.s32 %v15, 6
  %v64 = vshra.s32 %v16, 6
  %v65 = vshra.s32 %v17, 6
  %v66 = vshra.s32 %v18, 6
  %v67 = vshra.s32 %v19, 6
  %v68 = vshra.s32 %v20, 6
  %v69 = vshra.s32 %v21, 6
  %v70 = vshra.s32 %v22, 6
  %v71 = vshra.s32 %v23, 6
  %v72 = vshra.s32 %v24, 6
  %v73 = vshra.s32 %v25, 6
  %v74 = vshra.s32 %v26, 6
  %v75 = vshra.s32 %v27, 6
  %v76 = vshra.s32 %v28, 6
  %v77 = vshra.s32 %v29, 6
  %v78 = vshra.s32 %v30, 6
  %v79 = vshra.s32 %v31, 6
  %v80 = vshra.s32 %v32, 6
  %v81 = vcvt.s32.f32 %v33
  %v82 = vcvt.s32.f32 %v34
  %v83 = vcvt.s32.f32 %v35
  %v84 = vcvt.s32.f32 %v36
  %v85 = vcvt.s32.f32 %v37
  %v86 = vcvt.s32.f32 %v38
  %v87 = vcvt.s32.f32 %v39
  %v88 = vcvt.s32.f32 %v40
  %v89 = vcvt.s32.f32 %v41
  %v90 = vcvt.s32.f32 %v42
  %v91 = vcvt.s32.f32 %v43
  %v92 = vcvt.s32.f32 %v44
  %v93 = vcvt.s32.f32 %v45
  %v94 = vcvt.s32.f32 %v46
  %v95 = vcvt.s32.f32 %v47
  %v96 = vcvt.s32.f32 %v48
  %v97 = vcvt.s32.f32 %v49
  %v98 = vcvt.s32.f32 %v50
  %v99 = vcvt.s32.f32 %v51
  %v100 = vcvt.s32.f32 %v52
  %v101 = vcvt.s32.f32 %v53
  %v102 = vcvt.s32.f32 %v54
  %v103 = vcvt.s32.f32 %v55
  %v104 = vcvt.s32.f32 %v56
  %v105 = vadd.f32 %v81, 0.5
  %v106 = vadd.f32 %v82, 0.5
  %v107 = vadd.f32 %v83, 0.5
  %v108 = vadd.f32 %v84, 0.5
  %v109 = vadd.f32 %v85, 0.5
  %v110 = vadd.f32 %v86, 0.5
  %v111 = vadd.f32 %v87, 0.5
  %v112 = vadd.f32 %v88, 0.5
  %v113 = vadd.f32 %v89, 0.5
  %v114 = vadd.f32 %v90, 0.5
  %v115 = vadd.f32 %v91, 0.5
  %v116 = vadd.f32 %v92, 0.5
  %v117 = vadd.f32 %v93, 0.5
  %v118 = vadd.f32 %v94, 0.5
  %v119 = vadd.f32 %v95, 0.5
  %v120 = vadd.f32 %v96, 0.5
  %v121 = vadd.f32 %v97, 0.5
  %v122 = vadd.f32 %v98, 0.5
  %v123 = vadd.f32 %v99, 0.5
  %v124 = vadd.f32 %v100, 0.5
  %v125 = vadd.f32 %v101, 0.5
  %v126 = vadd.f32 %v102, 0.5
  %v127 = vadd.f32 %v103, 0.5
  %v128 = vadd.f32 %v104, 0.5
  %v129 = vmul.f32 %v105, 0.015625
  %v130 = vmul.f32 %v106, 0.015625
  %v131 = vmul.f32 %v107, 0.015625
  %v132 = vmul.f32 %v108, 0.015625
  %v133 = vmul.f32 %v109, 0.015625
  %v134 = vmul.f32 %v110, 0.015625
  %v135 = vmul.f32 %v111, 0.015625
  %v136 = vmul.f32 %v112, 0.015625
  %v137 = vmul.f32 %v113, 0.015625
  %v138 = vmul.f32 %v114, 0.015625
  %v139 = vmul.f32 %v115, 0.015625
  %v140 = vmul.f32 %v116, 0.015625
  %v141 = vmul.f32 %v117, 0.015625
  %v142 = vmul.f32 %v118, 0.015625
  %v143 = vmul.f32 %v119, 0.015625
  %v144 = vmul.f32 %v120, 0.015625
  %v145 = vmul.f32 %v121, 0.015625
  %v146 = vmul.f32 %v122, 0.015625
  %v147 = vmul.f32 %v123, 0.015625
  %v148 = vmul.f32 %v124, 0.015625
  %v149 = vmul.f32 %v125, 0.015625
  %v150 = vmul.f32 %v126, 0.015625
  %v151 = vmul.f32 %v127, 0.015625
  %v152 = vmul.f32 %v128, 0.015625
  %v153 = vcvt.s32.f32 %v57
  %v154 = vcvt.s32.f32 %v58
  %v155 = vcvt.s32.f32 %v59
  %v156 = vcvt.s32.f32 %v60
  %v157 = vcvt.s32.f32 %v61
  %v158 = vcvt.s32.f32 %v62
  %v159 = vcvt.s32.f32 %v63
  %v160 = vcvt.s32.f32 %v64
  %v161 = vcvt.s32.f32 %v65
  %v162 = vcvt.s32.f32 %v66
  %v163 = vcvt.s32.f32 %v67
  %v164 = vcvt.s32.f32 %v68
  %v165 = vcvt.s32.f32 %v69
  %v166 = vcvt.s32.f32 %v70
  %v167 = vcvt.s32.f32 %v71
  %v168 = vcvt.s32.f32 %v72
  %v169 = vcvt.s32.f32 %v73
  %v170 = vcvt.s32.f32 %v74
  %v171 = vcvt.s32.f32 %v75
  %v172 = vcvt.s32.f32 %v76
  %v173 = vcvt.s32.f32 %v77
  %v174 = vcvt.s32.f32 %v78
  %v175 = vcvt.s32.f32 %v79
  %v176 = vcvt.s32.f32 %v80
  %v177 = vadd.f32 %v153, 0.5
  %v178 = vadd.f32 %v154, 0.5
  %v179 = vadd.f32 %v155, 0.5
  %v180 = vadd.f32 %v156, 0.5
  %v181 = vadd.f32 %v157, 0.5
  %v182 = vadd.f32 %v158, 0.5
  %v183 = vadd.f32 %v159, 0.5
  %v184 = vadd.f32 %v160, 0.5
  %v185 = vadd.f32 %v161, 0.5
  %v186 = vadd.f32 %v162, 0.5
  %v187 = vadd.f32 %v163, 0.5
  %v188 = vadd.f32 %v164, 0.5
  %v189 = vadd.f32 %v165, 0.5
  %v190 = vadd.f32 %v166, 0.5
  %v191 = vadd.f32 %v167, 0.5
  %v192 = vadd.f32 %v168, 0.5
  %v193 = vadd.f32 %v169, 0.5
  %v194 = vadd.f32 %v170, 0.5
  %v195 = vadd.f32 %v171, 0.5
  %v196 = vadd.f32 %v172, 0.5
  %v197 = vadd.f32 %v173, 0.5
  %v198 = vadd.f32 %v174, 0.5
  %v199 = vadd.f32 %v175, 0.5
  %v200 = vadd.f32 %v176, 0.5
  %v201 = vmul.f32 %v177, 0.020833334
  %v202 = vmul.f32 %v178, 0.020833334
  %v203 = vmul.f32 %v179, 0.020833334
  %v204 = vmul.f32 %v180, 0.020833334
  %v205 = vmul.f32 %v181, 0.020833334
  %v206 = vmul.f32 %v182, 0.020833334
  %v207 = vmul.f32 %v183, 0.020833334
  %v208 = vmul.f32 %v184, 0.020833334
  %v209 = vmul.f32 %v185, 0.020833334
  %v210 = vmul.f32 %v186, 0.020833334
  %v211 = vmul.f32 %v187, 0.020833334
  %v212 = vmul.f32 %v188, 0.020833334
  %v213 = vmul.f32 %v189, 0.020833334
  %v214 = vmul.f32 %v190, 0.020833334
  %v215 = vmul.f32 %v191, 0.020833334
  %v216 = vmul.f32 %v192, 0.020833334
  %v217 = vmul.f32 %v193, 0.020833334
  %v218 = vmul.f32 %v194, 0.020833334
  %v219 = vmul.f32 %v195, 0.020833334
  %v220 = vmul.f32 %v196, 0.020833334
  %v221 = vmul.f32 %v197, 0.020833334
  %v222 = vmul.f32 %v198, 0.020833334
  %v223 = vmul.f32 %v199, 0.020833334
  %v224 = vmul.f32 %v200, 0.020833334
  %v225 = vld [vmem:[%s0] sm:$0xff]
  %227 = vset.pattern.permute.xlu0 0
  %228 = vperm.xlu0 %227, %v225
  %v229 = vpop.permute.xlu0 %228
  %v231 = vmul.f32 %v129, %v229
  %v232 = vmul.f32 %v130, %v229
  %v233 = vmul.f32 %v131, %v229
  %v234 = vmul.f32 %v132, %v229
  %v235 = vmul.f32 %v133, %v229
  %v236 = vmul.f32 %v134, %v229
  %v237 = vmul.f32 %v135, %v229
  %v238 = vmul.f32 %v136, %v229
  %v239 = vmul.f32 %v137, %v229
  %v240 = vmul.f32 %v138, %v229
  %v241 = vmul.f32 %v139, %v229
  %v242 = vmul.f32 %v140, %v229
  %v243 = vmul.f32 %v141, %v229
  %v244 = vmul.f32 %v142, %v229
  %v245 = vmul.f32 %v143, %v229
  %v246 = vmul.f32 %v144, %v229
  %v247 = vmul.f32 %v145, %v229
  %v248 = vmul.f32 %v146, %v229
  %v249 = vmul.f32 %v147, %v229
  %v250 = vmul.f32 %v148, %v229
  %v251 = vmul.f32 %v149, %v229
  %v252 = vmul.f32 %v150, %v229
  %v253 = vmul.f32 %v151, %v229
  %v254 = vmul.f32 %v152, %v229
  %255 = vset.pattern.permute.xlu0 1
  %256 = vperm.xlu0 %255, %v225
  %v257 = vpop.permute.xlu0 %256
  %v259 = vmul.f32 %v201, %v257
  %v260 = vmul.f32 %v202, %v257
  %v261 = vmul.f32 %v203, %v257
  %v262 = vmul.f32 %v204, %v257
  %v263 = vmul.f32 %v205, %v257
  %v264 = vmul.f32 %v206, %v257
  %v265 = vmul.f32 %v207, %v257
  %v266 = vmul.f32 %v208, %v257
  %v267 = vmul.f32 %v209, %v257
  %v268 = vmul.f32 %v210, %v257
  %v269 = vmul.f32 %v211, %v257
  %v270 = vmul.f32 %v212, %v257
  %v271 = vmul.f32 %v213, %v257
  %v272 = vmul.f32 %v214, %v257
  %v273 = vmul.f32 %v215, %v257
  %v274 = vmul.f32 %v216, %v257
  %v275 = vmul.f32 %v217, %v257
  %v276 = vmul.f32 %v218, %v257
  %v277 = vmul.f32 %v219, %v257
  %v278 = vmul.f32 %v220, %v257
  %v279 = vmul.f32 %v221, %v257
  %v280 = vmul.f32 %v222, %v257
  %v281 = vmul.f32 %v223, %v257
  %v282 = vmul.f32 %v224, %v257
  %v283 = vadd.f32 %v231, %v259
  %v284 = vadd.f32 %v232, %v260
  %v285 = vadd.f32 %v233, %v261
  %v286 = vadd.f32 %v234, %v262
  %v287 = vadd.f32 %v235, %v263
  %v288 = vadd.f32 %v236, %v264
  %v289 = vadd.f32 %v237, %v265
  %v290 = vadd.f32 %v238, %v266
  %v291 = vadd.f32 %v239, %v267
  %v292 = vadd.f32 %v240, %v268
  %v293 = vadd.f32 %v241, %v269
  %v294 = vadd.f32 %v242, %v270
  %v295 = vadd.f32 %v243, %v271
  %v296 = vadd.f32 %v244, %v272
  %v297 = vadd.f32 %v245, %v273
  %v298 = vadd.f32 %v246, %v274
  %v299 = vadd.f32 %v247, %v275
  %v300 = vadd.f32 %v248, %v276
  %v301 = vadd.f32 %v249, %v277
  %v302 = vadd.f32 %v250, %v278
  %v303 = vadd.f32 %v251, %v279
  %v304 = vadd.f32 %v252, %v280
  %v305 = vadd.f32 %v253, %v281
  %v306 = vadd.f32 %v254, %v282
  %307 = vset.pattern.permute.xlu0 2
  %308 = vperm.xlu0 %307, %v225
  %v309 = vpop.permute.xlu0 %308
  %v311 = vadd.f32 %v283, %v309
  %v312 = vadd.f32 %v284, %v309
  %v313 = vadd.f32 %v285, %v309
  %v314 = vadd.f32 %v286, %v309
  %v315 = vadd.f32 %v287, %v309
  %v316 = vadd.f32 %v288, %v309
  %v317 = vadd.f32 %v289, %v309
  %v318 = vadd.f32 %v290, %v309
  %v319 = vadd.f32 %v291, %v309
  %v320 = vadd.f32 %v292, %v309
  %v321 = vadd.f32 %v293, %v309
  %v322 = vadd.f32 %v294, %v309
  %v323 = vadd.f32 %v295, %v309
  %v324 = vadd.f32 %v296, %v309
  %v325 = vadd.f32 %v297, %v309
  %v326 = vadd.f32 %v298, %v309
  %v327 = vadd.f32 %v299, %v309
  %v328 = vadd.f32 %v300, %v309
  %v329 = vadd.f32 %v301, %v309
  %v330 = vadd.f32 %v302, %v309
  %v331 = vadd.f32 %v303, %v309
  %v332 = vadd.f32 %v304, %v309
  %v333 = vadd.f32 %v305, %v309
  %v334 = vadd.f32 %v306, %v309
  %v335 = vmax.f32 %v311, 0.0001
  %v336 = vmax.f32 %v312, 0.0001
  %v337 = vmax.f32 %v313, 0.0001
  %v338 = vmax.f32 %v314, 0.0001
  %v339 = vmax.f32 %v315, 0.0001
  %v340 = vmax.f32 %v316, 0.0001
  %v341 = vmax.f32 %v317, 0.0001
  %v342 = vmax.f32 %v318, 0.0001
  %v343 = vmax.f32 %v319, 0.0001
  %v344 = vmax.f32 %v320, 0.0001
  %v345 = vmax.f32 %v321, 0.0001
  %v346 = vmax.f32 %v322, 0.0001
  %v347 = vmax.f32 %v323, 0.0001
  %v348 = vmax.f32 %v324, 0.0001
  %v349 = vmax.f32 %v325, 0.0001
  %v350 = vmax.f32 %v326, 0.0001
  %v351 = vmax.f32 %v327, 0.0001
  %v352 = vmax.f32 %v328, 0.0001
  %v353 = vmax.f32 %v329, 0.0001
  %v354 = vmax.f32 %v330, 0.0001
  %v355 = vmax.f32 %v331, 0.0001
  %v356 = vmax.f32 %v332, 0.0001
  %v357 = vmax.f32 %v333, 0.0001
  %v358 = vmax.f32 %v334, 0.0001
  %v359 = vrcp.pop %v335
  %v360 = vrcp.pop %v336
  %v361 = vrcp.pop %v337
  %v362 = vrcp.pop %v338
  %v363 = vrcp.pop %v339
  %v364 = vrcp.pop %v340
  %v365 = vrcp.pop %v341
  %v366 = vrcp.pop %v342
  %v367 = vrcp.pop %v343
  %v368 = vrcp.pop %v344
  %v369 = vrcp.pop %v345
  %v370 = vrcp.pop %v346
  %v371 = vrcp.pop %v347
  %v372 = vrcp.pop %v348
  %v373 = vrcp.pop %v349
  %v374 = vrcp.pop %v350
  %v375 = vrcp.pop %v351
  %v376 = vrcp.pop %v352
  %v377 = vrcp.pop %v353
  %v378 = vrcp.pop %v354
  %v379 = vrcp.pop %v355
  %v380 = vrcp.pop %v356
  %v381 = vrcp.pop %v357
  %v382 = vrcp.pop %v358
  %v383 = vmul.f32 %v335, %v359
  %v384 = vmul.f32 %v336, %v360
  %v385 = vmul.f32 %v337, %v361
  %v386 = vmul.f32 %v338, %v362
  %v387 = vmul.f32 %v339, %v363
  %v388 = vmul.f32 %v340, %v364
  %v389 = vmul.f32 %v341, %v365
  %v390 = vmul.f32 %v342, %v366
  %v391 = vmul.f32 %v343, %v367
  %v392 = vmul.f32 %v344, %v368
  %v393 = vmul.f32 %v345, %v369
  %v394 = vmul.f32 %v346, %v370
  %v395 = vmul.f32 %v347, %v371
  %v396 = vmul.f32 %v348, %v372
  %v397 = vmul.f32 %v349, %v373
  %v398 = vmul.f32 %v350, %v374
  %v399 = vmul.f32 %v351, %v375
  %v400 = vmul.f32 %v352, %v376
  %v401 = vmul.f32 %v353, %v377
  %v402 = vmul.f32 %v354, %v378
  %v403 = vmul.f32 %v355, %v379
  %v404 = vmul.f32 %v356, %v380
  %v405 = vmul.f32 %v357, %v381
  %v406 = vmul.f32 %v358, %v382
  %v407 = vsub.f32 2.0, %v383
  %v408 = vsub.f32 2.0, %v384
  %v409 = vsub.f32 2.0, %v385
  %v410 = vsub.f32 2.0, %v386
  %v411 = vsub.f32 2.0, %v387
  %v412 = vsub.f32 2.0, %v388
  %v413 = vsub.f32 2.0, %v389
  %v414 = vsub.f32 2.0, %v390
  %v415 = vsub.f32 2.0, %v391
  %v416 = vsub.f32 2.0, %v392
  %v417 = vsub.f32 2.0, %v393
  %v418 = vsub.f32 2.0, %v394
  %v419 = vsub.f32 2.0, %v395
  %v420 = vsub.f32 2.0, %v396
  %v421 = vsub.f32 2.0, %v397
  %v422 = vsub.f32 2.0, %v398
  %v423 = vsub.f32 2.0, %v399
  %v424 = vsub.f32 2.0, %v400
  %v425 = vsub.f32 2.0, %v401
  %v426 = vsub.f32 2.0, %v402
  %v427 = vsub.f32 2.0, %v403
  %v428 = vsub.f32 2.0, %v404
  %v429 = vsub.f32 2.0, %v405
  %v430 = vsub.f32 2.0, %v406
  %v431 = vmul.f32 %v359, %v407
  %v432 = vmul.f32 %v360, %v408
  %v433 = vmul.f32 %v361, %v409
  %v434 = vmul.f32 %v362, %v410
  %v435 = vmul.f32 %v363, %v411
  %v436 = vmul.f32 %v364, %v412
  %v437 = vmul.f32 %v365, %v413
  %v438 = vmul.f32 %v366, %v414
  %v439 = vmul.f32 %v367, %v415
  %v440 = vmul.f32 %v368, %v416
  %v441 = vmul.f32 %v369, %v417
  %v442 = vmul.f32 %v370, %v418
  %v443 = vmul.f32 %v371, %v419
  %v444 = vmul.f32 %v372, %v420
  %v445 = vmul.f32 %v373, %v421
  %v446 = vmul.f32 %v374, %v422
  %v447 = vmul.f32 %v375, %v423
  %v448 = vmul.f32 %v376, %v424
  %v449 = vmul.f32 %v377, %v425
  %v450 = vmul.f32 %v378, %v426
  %v451 = vmul.f32 %v379, %v427
  %v452 = vmul.f32 %v380, %v428
  %v453 = vmul.f32 %v381, %v429
  %v454 = vmul.f32 %v382, %v430
  %455 = vset.pattern.permute.xlu0 3
  %456 = vperm.xlu0 %455, %v225
  %v457 = vpop.permute.xlu0 %456
  %v459 = vmul.f32 %v457, %v431
  %v460 = vmul.f32 %v457, %v432
  %v461 = vmul.f32 %v457, %v433
  %v462 = vmul.f32 %v457, %v434
  %v463 = vmul.f32 %v457, %v435
  %v464 = vmul.f32 %v457, %v436
  %v465 = vmul.f32 %v457, %v437
  %v466 = vmul.f32 %v457, %v438
  %v467 = vmul.f32 %v457, %v439
  %v468 = vmul.f32 %v457, %v440
  %v469 = vmul.f32 %v457, %v441
  %v470 = vmul.f32 %v457, %v442
  %v471 = vmul.f32 %v457, %v443
  %v472 = vmul.f32 %v457, %v444
  %v473 = vmul.f32 %v457, %v445
  %v474 = vmul.f32 %v457, %v446
  %v475 = vmul.f32 %v457, %v447
  %v476 = vmul.f32 %v457, %v448
  %v477 = vmul.f32 %v457, %v449
  %v478 = vmul.f32 %v457, %v450
  %v479 = vmul.f32 %v457, %v451
  %v480 = vmul.f32 %v457, %v452
  %v481 = vmul.f32 %v457, %v453
  %v482 = vmul.f32 %v457, %v454
  %v483 = vmin.f32 %v459, 10.0
  %v484 = vmin.f32 %v460, 10.0
  %v485 = vmin.f32 %v461, 10.0
  %v486 = vmin.f32 %v462, 10.0
  %v487 = vmin.f32 %v463, 10.0
  %v488 = vmin.f32 %v464, 10.0
  %v489 = vmin.f32 %v465, 10.0
  %v490 = vmin.f32 %v466, 10.0
  %v491 = vmin.f32 %v467, 10.0
  %v492 = vmin.f32 %v468, 10.0
  %v493 = vmin.f32 %v469, 10.0
  %v494 = vmin.f32 %v470, 10.0
  %v495 = vmin.f32 %v471, 10.0
  %v496 = vmin.f32 %v472, 10.0
  %v497 = vmin.f32 %v473, 10.0
  %v498 = vmin.f32 %v474, 10.0
  %v499 = vmin.f32 %v475, 10.0
  %v500 = vmin.f32 %v476, 10.0
  %v501 = vmin.f32 %v477, 10.0
  %v502 = vmin.f32 %v478, 10.0
  %v503 = vmin.f32 %v479, 10.0
  %v504 = vmin.f32 %v480, 10.0
  %v505 = vmin.f32 %v481, 10.0
  %v506 = vmin.f32 %v482, 10.0
  %507 = vst [vmem:[%s1] sm:$0xff] %v483
  %508 = vst [vmem:[%s1 + $0x8] sm:$0xff] %v484
  %509 = vst [vmem:[%s1 + $0x10] sm:$0xff] %v485
  %510 = vst [vmem:[%s1 + $0x18] sm:$0xff] %v486
  %511 = vst [vmem:[%s1 + $0x20] sm:$0xff] %v487
  %512 = vst [vmem:[%s1 + $0x28] sm:$0xff] %v488
  %513 = vst [vmem:[%s1 + $0x30] sm:$0xff] %v489
  %514 = vst [vmem:[%s1 + $0x38] sm:$0xff] %v490
  %515 = vst [vmem:[%s1 + $0x40] sm:$0xff] %v491
  %516 = vst [vmem:[%s1 + $0x48] sm:$0xff] %v492
  %517 = vst [vmem:[%s1 + $0x50] sm:$0xff] %v493
  %518 = vst [vmem:[%s1 + $0x58] sm:$0xff] %v494
  %519 = vst [vmem:[%s1 + $0x60] sm:$0xff] %v495
  %520 = vst [vmem:[%s1 + $0x68] sm:$0xff] %v496
  %521 = vst [vmem:[%s1 + $0x70] sm:$0xff] %v497
  %522 = vst [vmem:[%s1 + $0x78] sm:$0xff] %v498
  %523 = vst [vmem:[%s1 + $0x80] sm:$0xff] %v499
  %524 = vst [vmem:[%s1 + $0x88] sm:$0xff] %v500
  %525 = vst [vmem:[%s1 + $0x90] sm:$0xff] %v501
  %526 = vst [vmem:[%s1 + $0x98] sm:$0xff] %v502
  %527 = vst [vmem:[%s1 + $0xa0] sm:$0xff] %v503
  %528 = vst [vmem:[%s1 + $0xa8] sm:$0xff] %v504
  %529 = vst [vmem:[%s1 + $0xb0] sm:$0xff] %v505
  %530 = vst [vmem:[%s1 + $0xb8] sm:$0xff] %v506
  // Predicated region
  $region6: #{_plane_to_depth_impl.1} parent=0 // pred_check
    _
  $region7: #{_plane_to_depth_impl.1} parent=0 // pred_check_branch
    %532 = sbr.rel (0) target = $region9
  $region8: #{_plane_to_depth_impl.1} parent=0 // pred_region
    _
  $region9: #{_plane_to_depth_impl.1} parent=0 // pred_fallthru
    _
  // Predicated region
  $region10: #{_plane_to_depth_impl.1} parent=0 // pred_check
    _
  $region11: #{_plane_to_depth_impl.1} parent=0 // pred_check_branch
    %534 = sbr.rel (0) target = $region13
  $region12: #{_plane_to_depth_impl.1} parent=0 // pred_region
    _
  $region13: #{_plane_to_depth_impl.1} parent=0 // pred_fallthru
    _

</llo_original>
